<compile_context>
chip_gen: v7x
topology: tpu7x:2x2x1
jax: 0.10.0
libtpu: 0.0.40
codegen_flags: <defaults>
</compile_context>

<pallas_src>
import functools
import math

import jax
import jax.numpy as jnp
from jax import lax
from jax.experimental import pallas as pl
from jax.experimental.pallas import tpu as pltpu


# ----------------------------- config -------------------------------------
CONFIG = dict(
    hidden_size=32,
    n_routed_experts=8,
    num_experts_per_tok=2,     # top_k
    scoring_func="softmax",
    norm_topk_prob=True,
    routed_scaling_factor=1.0,
    topk_method="greedy",
    aux_loss_alpha=0.0,        # inference path -> aux_loss is None
    seq_aux=False,
)


def _round_up(x, m):
    return (x + m - 1) // m * m


# ----------------------------- kernel --------------------------------------
def moe_gate_kernel(x_ref, w_ref, idx_ref, wgt_ref, *, top_k, norm_topk_prob,
                    routed_scaling_factor):
    # x_ref: (tile_t, H) in its native dtype (bf16 in real models, f32 here);
    # w_ref: (E, H).  Feed native dtypes straight to the MXU and accumulate in
    # f32 via preferred_element_type (no up-cast => no extra VMEM/HBM traffic).
    x = x_ref[...]
    w = w_ref[...]

    # logits^T = W @ x^T  -> (E, tile_t): tokens on the lane axis.
    logits = lax.dot_general(
        w, x, (((1,), (1,)), ((), ())), preferred_element_type=jnp.float32)

    n_experts = logits.shape[0]

    # Softmax over experts (sublane axis); reciprocal runs on the EUP slot.
    m = jnp.max(logits, axis=0, keepdims=True)
    e = jnp.exp(logits - m)
    scores = e * pl.reciprocal(jnp.sum(e, axis=0, keepdims=True), approx=True)

    # Greedy top-k with a single cross-sublane reduction per k: pack
    # (score, index) into one sortable int32 key.  Softmax scores are positive
    # floats, so their bit patterns order like signed ints; the low idx_bits
    # mantissa bits are replaced by (E-1-idx) so ties break toward the LOWEST
    # expert index (matching torch.topk).  Value error from the cleared
    # mantissa bits is ~2^-21 relative (negligible for gating weights).
    idx_bits = max(1, (n_experts - 1).bit_length())
    low_mask = (1 << idx_bits) - 1
    e_iota = lax.broadcasted_iota(jnp.int32, scores.shape, 0)
    keys = jnp.bitwise_or(
        jnp.bitwise_and(pltpu.bitcast(scores, jnp.int32), ~low_mask),
        (n_experts - 1) - e_iota)

    wsum = jnp.zeros((1, scores.shape[1]), jnp.float32)
    for k in range(top_k):
        best = jnp.max(keys, axis=0, keepdims=True)               # (1, tile_t)
        idx_k = (n_experts - 1) - jnp.bitwise_and(best, low_mask)
        val_k = pltpu.bitcast(jnp.bitwise_and(best, ~low_mask), jnp.float32)
        # Direct row stores into the lane-dense output blocks.
        idx_ref[pl.ds(k, 1), :] = idx_k
        wgt_ref[pl.ds(k, 1), :] = val_k
        wsum = wsum + val_k
        if k + 1 < top_k:
            keys = jnp.where(keys == best, jnp.iinfo(jnp.int32).min, keys)

    if top_k > 1 and norm_topk_prob:
        wgt_ref[...] = wgt_ref[...] * pl.reciprocal(wsum + 1e-20, approx=True)
    else:
        wgt_ref[...] = wgt_ref[...] * routed_scaling_factor


# ----------------------------- wrapper --------------------------------------
def _pick_tile_t(n_tokens, h, itemsize, requested):
    """Pick a token-tile size.

    Keeps the double-buffered x tile under ~24 MiB so the pipeline stays
    double-buffered on v7x (64 MiB physical VMEM); v5e/v6e (128 MiB) simply
    enjoy the larger tile.  Multi-tile grids keep tile_t a multiple of 128 so
    output stores stay lane-aligned; a single tile may shrink to cover exactly
    all (padded) tokens.
    """
    budget = 24 << 20
    tile = max(128, requested)
    while tile > 128 and 2 * tile * h * itemsize > budget:
        tile //= 2
    full = _round_up(n_tokens, 8)
    if full <= tile:
        return full                       # one tile covers everything
    return tile


def moe_gate(hidden_states, weight, config, *, tile_t=1024, interpret=False):
    """hidden_states: (bsz, seq_len, h); weight: (n_routed_experts, h).

    Returns (topk_idx (T, top_k) int32, topk_weight (T, top_k) f32, aux_loss).
    """
    bsz, seq_len, h = hidden_states.shape
    n_experts, h_w = weight.shape
    assert h_w == h
    top_k = config["num_experts_per_tok"]
    assert config["scoring_func"] == "softmax"
    assert config["topk_method"] == "greedy"
    # TODO(synk): 'group_limited_greedy' routing and the training-time aux
    # loss (aux_loss_alpha > 0, seq_aux) are not implemented; inference only.

    x = hidden_states.reshape(-1, h)                      # (T, H)
    T = x.shape[0]

    tile = _pick_tile_t(T, h, x.dtype.itemsize, tile_t)
    t_pad = _round_up(T, tile)
    if t_pad != T:
        x = jnp.pad(x, ((0, t_pad - T), (0, 0)))          # padded rows sliced off
    grid = t_pad // tile

    kernel = functools.partial(
        moe_gate_kernel,
        top_k=top_k,
        norm_topk_prob=config["norm_topk_prob"],
        routed_scaling_factor=config["routed_scaling_factor"],
    )

    flops = 2 * t_pad * h * n_experts
    bytes_accessed = (t_pad * h * x.dtype.itemsize
                      + n_experts * h * weight.dtype.itemsize
                      + 2 * t_pad * top_k * 4)
    vmem_need = (2 * tile * h * x.dtype.itemsize           # double-buffered x
                 + 2 * n_experts * h * weight.dtype.itemsize
                 + 4 * tile * top_k * 4                    # double-buffered outs
                 + 6 * tile * n_experts * 4)               # f32 intermediates
    vmem_limit = int(min(max(vmem_need + (4 << 20), 32 << 20), 48 << 20))

    idx_t, wgt_t = pl.pallas_call(
        kernel,
        out_shape=(
            jax.ShapeDtypeStruct((top_k, t_pad), jnp.int32),
            jax.ShapeDtypeStruct((top_k, t_pad), jnp.float32),
        ),
        grid_spec=pltpu.PrefetchScalarGridSpec(
            num_scalar_prefetch=0,
            grid=(grid,),
            in_specs=[
                pl.BlockSpec((tile, h), lambda i: (i, 0)),
                pl.BlockSpec((n_experts, h), lambda i: (0, 0)),
            ],
            out_specs=[
                pl.BlockSpec((top_k, tile), lambda i: (0, i)),
                pl.BlockSpec((top_k, tile), lambda i: (0, i)),
            ],
        ),
        compiler_params=pltpu.CompilerParams(
            dimension_semantics=("parallel",),   # megacore-shardable on v7x
            vmem_limit_bytes=vmem_limit,
        ),
        cost_estimate=pl.CostEstimate(
            flops=flops,
            transcendentals=t_pad * n_experts,
            bytes_accessed=bytes_accessed,
        ),
        interpret=interpret,
    )(x, weight)

    # Tiny (top_k, T) -> (T, top_k) transposes in the wrapper keep the kernel's
    # output stores lane-dense.
    topk_idx = idx_t[:, :T].T
    topk_weight = wgt_t[:, :T].T

    aux_loss = None   # eval-mode path (alpha == 0), matching the PyTorch module
    return topk_idx, topk_weight, aux_loss


# ----------------------------- main -----------------------------------------
if __name__ == "__main__":
    key = jax.random.PRNGKey(0)
    k_x, k_w = jax.random.split(key)

    bsz, seq_len = 2, 8
    h = CONFIG["hidden_size"]
    n_experts = CONFIG["n_routed_experts"]
    top_k = CONFIG["num_experts_per_tok"]

    # kaiming_uniform_(a=sqrt(5)) => U(-1/sqrt(fan_in), 1/sqrt(fan_in))
    bound = 1.0 / math.sqrt(h)
    weight = jax.random.uniform(
        k_w, (n_experts, h), dtype=jnp.float32, minval=-bound, maxval=bound)

    hidden_states = jax.random.normal(k_x, (bsz, seq_len, h), dtype=jnp.float32)

    topk_idx, topk_weight, aux_loss = moe_gate(hidden_states, weight, CONFIG)
    jax.block_until_ready((topk_idx, topk_weight))

    # --- sanity check vs a plain-JAX reference -------------------------------
    x32 = hidden_states.reshape(-1, h).astype(jnp.float32)
    scores_ref = jax.nn.softmax(x32 @ weight.T, axis=-1)
    tv_ref, ti_ref = lax.top_k(scores_ref, top_k)
    tw_ref = tv_ref / (jnp.sum(tv_ref, axis=-1, keepdims=True) + 1e-20)

    assert topk_idx.shape == (bsz * seq_len, top_k)
    assert topk_weight.shape == (bsz * seq_len, top_k)
    assert topk_idx.dtype == jnp.int32
    assert aux_loss is None

    # Tie-robust index check: the experts the kernel selected reproduce the
    # reference top-k scores.
    gathered = jnp.take_along_axis(scores_ref, topk_idx, axis=-1)
    assert jnp.allclose(jnp.sort(gathered, axis=-1), jnp.sort(tv_ref, axis=-1),
                        atol=1e-5), "index mismatch"
    # Weights: approx reciprocal in the renorm => ~2^-12 relative tolerance.
    assert jnp.allclose(jnp.sort(topk_weight, axis=-1),
                        jnp.sort(tw_ref, axis=-1),
                        atol=1e-3, rtol=1e-3), "weight mismatch"

    print("KERNEL_OK")
</pallas_src>

<mosaic_0001>
module attributes {stable_mosaic.version = 11 : i64} {
  func.func @moe_gate_kernel(%arg0: i32, %arg1: memref<16x32xf32, #tpu.memory_space<vmem>>, %arg2: memref<8x32xf32, #tpu.memory_space<vmem>>, %arg3: memref<2x16xi32, #tpu.memory_space<vmem>>, %arg4: memref<2x16xf32, #tpu.memory_space<vmem>>) attributes {dimension_semantics = [#tpu.dimension_semantics<parallel>], iteration_bounds = array<i64: 1>, scalar_prefetch = 0 : i64, scratch_operands = 0 : i64, tpu.core_type = #tpu.core_type<tc>, window_params = [{transform_indices = @transform_0, window_bounds = array<i64: 16, 32>}, {pipeline_mode = #tpu.pipeline_mode<synchronous>, transform_indices = @transform_1, window_bounds = array<i64: 8, 32>}, {transform_indices = @transform_2, window_bounds = array<i64: 2, 16>}, {transform_indices = @transform_3, window_bounds = array<i64: 2, 16>}]} {
    %c0 = arith.constant 0 : index
    %c0_0 = arith.constant 0 : index
    %0 = vector.load %arg1[%c0, %c0_0] : memref<16x32xf32, #tpu.memory_space<vmem>>, vector<16x32xf32>
    %c0_1 = arith.constant 0 : index
    %c0_2 = arith.constant 0 : index
    %1 = vector.load %arg2[%c0_1, %c0_2] : memref<8x32xf32, #tpu.memory_space<vmem>>, vector<8x32xf32>
    %cst = arith.constant dense<0.000000e+00> : vector<8x16xf32>
    %2 = tpu.matmul %1, %0, %cst {dimension_numbers = #tpu.dot_dimension_numbers<[1], [1], [0], [0], [0, 0, 1, 0], [], []>} : vector<8x32xf32>, vector<16x32xf32>, vector<8x16xf32> -> vector<8x16xf32>
    %cst_3 = arith.constant dense<0xFF800000> : vector<16xf32>
    %3 = vector.multi_reduction <maximumf>, %2, %cst_3 [0] : vector<8x16xf32> to vector<16xf32>
    %4 = vector.shape_cast %3 : vector<16xf32> to vector<1x16xf32>
    %5 = vector.broadcast %4 : vector<1x16xf32> to vector<8x16xf32>
    %6 = arith.subf %2, %5 : vector<8x16xf32>
    %7 = math.exp %6 : vector<8x16xf32>
    %cst_4 = arith.constant dense<0.000000e+00> : vector<16xf32>
    %8 = vector.multi_reduction <add>, %7, %cst_4 [0] : vector<8x16xf32> to vector<16xf32>
    %9 = vector.shape_cast %8 : vector<16xf32> to vector<1x16xf32>
    %10 = tpu.reciprocal %9 {approx = true} : vector<1x16xf32> -> vector<1x16xf32>
    %11 = vector.broadcast %10 : vector<1x16xf32> to vector<8x16xf32>
    %12 = arith.mulf %7, %11 : vector<8x16xf32>
    %13 = tpu.iota {dimensions = array<i32: 0>} : vector<8x16xi32>
    %14 = tpu.bitcast %12 : vector<8x16xf32> -> vector<8x16xi32>
    %c-8_i32 = arith.constant -8 : i32
    %15 = vector.broadcast %c-8_i32 : i32 to vector<8x16xi32>
    %16 = arith.andi %14, %15 : vector<8x16xi32>
    %c7_i32 = arith.constant 7 : i32
    %17 = vector.broadcast %c7_i32 : i32 to vector<8x16xi32>
    %18 = arith.subi %17, %13 : vector<8x16xi32>
    %19 = arith.ori %16, %18 : vector<8x16xi32>
    %cst_5 = arith.constant 0.000000e+00 : f32
    %20 = vector.broadcast %cst_5 : f32 to vector<1x16xf32>
    %cst_6 = arith.constant dense<-2147483648> : vector<16xi32>
    %21 = vector.multi_reduction <maxsi>, %19, %cst_6 [0] : vector<8x16xi32> to vector<16xi32>
    %22 = vector.shape_cast %21 : vector<16xi32> to vector<1x16xi32>
    %c7_i32_7 = arith.constant 7 : i32
    %23 = vector.broadcast %c7_i32_7 : i32 to vector<1x16xi32>
    %24 = arith.andi %22, %23 : vector<1x16xi32>
    %c7_i32_8 = arith.constant 7 : i32
    %25 = vector.broadcast %c7_i32_8 : i32 to vector<1x16xi32>
    %26 = arith.subi %25, %24 : vector<1x16xi32>
    %c-8_i32_9 = arith.constant -8 : i32
    %27 = vector.broadcast %c-8_i32_9 : i32 to vector<1x16xi32>
    %28 = arith.andi %22, %27 : vector<1x16xi32>
    %29 = tpu.bitcast %28 : vector<1x16xi32> -> vector<1x16xf32>
    %c0_10 = arith.constant 0 : index
    %c0_11 = arith.constant 0 : index
    %30 = vector.load %arg3[%c0_10, %c0_11] : memref<2x16xi32, #tpu.memory_space<vmem>>, vector<1x16xi32>
    tpu.vector_store %arg3[%c0_10, %c0_11], %26 {strides = array<i32>} : memref<2x16xi32, #tpu.memory_space<vmem>>, vector<1x16xi32>,
    %c0_12 = arith.constant 0 : index
    %c0_13 = arith.constant 0 : index
    %31 = vector.load %arg4[%c0_12, %c0_13] : memref<2x16xf32, #tpu.memory_space<vmem>>, vector<1x16xf32>
    tpu.vector_store %arg4[%c0_12, %c0_13], %29 {strides = array<i32>} : memref<2x16xf32, #tpu.memory_space<vmem>>, vector<1x16xf32>,
    %32 = arith.addf %20, %29 : vector<1x16xf32>
    %33 = vector.broadcast %22 : vector<1x16xi32> to vector<8x16xi32>
    %34 = arith.cmpi eq, %19, %33 : vector<8x16xi32>
    %c-2147483648_i32 = arith.constant -2147483648 : i32
    %35 = vector.broadcast %c-2147483648_i32 : i32 to vector<8x16xi32>
    %36 = arith.select %34, %35, %19 : vector<8x16xi1>, vector<8x16xi32>
    %cst_14 = arith.constant dense<-2147483648> : vector<16xi32>
    %37 = vector.multi_reduction <maxsi>, %36, %cst_14 [0] : vector<8x16xi32> to vector<16xi32>
    %38 = vector.shape_cast %37 : vector<16xi32> to vector<1x16xi32>
    %c7_i32_15 = arith.constant 7 : i32
    %39 = vector.broadcast %c7_i32_15 : i32 to vector<1x16xi32>
    %40 = arith.andi %38, %39 : vector<1x16xi32>
    %c7_i32_16 = arith.constant 7 : i32
    %41 = vector.broadcast %c7_i32_16 : i32 to vector<1x16xi32>
    %42 = arith.subi %41, %40 : vector<1x16xi32>
    %c-8_i32_17 = arith.constant -8 : i32
    %43 = vector.broadcast %c-8_i32_17 : i32 to vector<1x16xi32>
    %44 = arith.andi %38, %43 : vector<1x16xi32>
    %45 = tpu.bitcast %44 : vector<1x16xi32> -> vector<1x16xf32>
    %c1 = arith.constant 1 : index
    %c0_18 = arith.constant 0 : index
    %46 = vector.load %arg3[%c1, %c0_18] : memref<2x16xi32, #tpu.memory_space<vmem>>, vector<1x16xi32>
    tpu.vector_store %arg3[%c1, %c0_18], %42 {strides = array<i32>} : memref<2x16xi32, #tpu.memory_space<vmem>>, vector<1x16xi32>,
    %c1_19 = arith.constant 1 : index
    %c0_20 = arith.constant 0 : index
    %47 = vector.load %arg4[%c1_19, %c0_20] : memref<2x16xf32, #tpu.memory_space<vmem>>, vector<1x16xf32>
    tpu.vector_store %arg4[%c1_19, %c0_20], %45 {strides = array<i32>} : memref<2x16xf32, #tpu.memory_space<vmem>>, vector<1x16xf32>,
    %48 = arith.addf %32, %45 : vector<1x16xf32>
    %c0_21 = arith.constant 0 : index
    %c0_22 = arith.constant 0 : index
    %49 = vector.load %arg4[%c0_21, %c0_22] : memref<2x16xf32, #tpu.memory_space<vmem>>, vector<2x16xf32>
    %cst_23 = arith.constant 9.99999968E-21 : f32
    %50 = vector.broadcast %cst_23 : f32 to vector<1x16xf32>
    %51 = arith.addf %48, %50 : vector<1x16xf32>
    %52 = tpu.reciprocal %51 {approx = true} : vector<1x16xf32> -> vector<1x16xf32>
    %53 = vector.broadcast %52 : vector<1x16xf32> to vector<2x16xf32>
    %54 = arith.mulf %49, %53 : vector<2x16xf32>
    %c0_24 = arith.constant 0 : index
    %c0_25 = arith.constant 0 : index
    %55 = vector.load %arg4[%c0_24, %c0_25] : memref<2x16xf32, #tpu.memory_space<vmem>>, vector<2x16xf32>
    tpu.vector_store %arg4[%c0_24, %c0_25], %54 {strides = array<i32>} : memref<2x16xf32, #tpu.memory_space<vmem>>, vector<2x16xf32>,
    return
  }
  func.func @transform_0(%arg0: i32) -> (i32, i32) {
    %c0_i32 = arith.constant 0 : i32
    %c0_i32_0 = arith.constant 0 : i32
    return %arg0, %c0_i32 : i32, i32
  }
  func.func @transform_1(%arg0: i32) -> (i32, i32) {
    %c0_i32 = arith.constant 0 : i32
    %c0_i32_0 = arith.constant 0 : i32
    %c0_i32_1 = arith.constant 0 : i32
    return %c0_i32, %c0_i32_0 : i32, i32
  }
  func.func @transform_2(%arg0: i32) -> (i32, i32) {
    %c0_i32 = arith.constant 0 : i32
    %c0_i32_0 = arith.constant 0 : i32
    return %c0_i32, %arg0 : i32, i32
  }
  func.func @transform_3(%arg0: i32) -> (i32, i32) {
    %c0_i32 = arith.constant 0 : i32
    %c0_i32_0 = arith.constant 0 : i32
    return %c0_i32, %arg0 : i32, i32
  }
}

</mosaic_0001>

<llo_original>
// kernel: tpu_custom_call.1
$region0: #{tpu_custom_call.1}
  #allocation0 [shape = 'u32[]', space=smem, size = 0x4, offset = 0x4, fixed_abs, tag = 'smem constant byte address 0x4 - core index']
  #allocation1 [shape = 'u32[144,128]{1,0:T(1,128)}', space=vmem, size = 0x12000, scoped, tag = 'internal scratch']
  %s0 = inlined_call_operand.hbm [shape: f32[16,32], index: 0, kind: input, shape index: {}]
  %s1 = inlined_call_operand.hbm [shape: f32[8,32], index: 1, kind: input, shape index: {}]
  %s2 = inlined_call_operand.hbm [shape: s32[2,16], index: 2, kind: output, shape index: {0}]
  %s3 = inlined_call_operand.hbm [shape: f32[2,16], index: 3, kind: output, shape index: {1}]
  %4 = xla_tuple %s2, %s3
  %s5 = sld [smem:[#allocation0]]
  $region34: #{tpu_custom_call.1} parent=0
    _
  %s7 = ssub.s32 1, %s5
  %s8 = scalar_select 0, %s7, %s5
  $region1: #{tpu_custom_call.1} parent=0
    #allocation2 [shape = 'u8[8192]{0}', space=vmem, size = 0x2000, scoped, tag = 'input window, operand 0, single buffered']
    #allocation3 [shape = 's32[1]{0}', space=sflag, size = 0x4, scoped, tag = 'scoped memory for tpu_custom_call.1']
    #allocation4 [shape = 's32[1]{0}', space=sflag, size = 0x4, scoped, tag = 'scoped memory for tpu_custom_call.1']
    #allocation5 [shape = 'u8[4096]{0}', space=vmem, size = 0x1000, scoped, tag = 'input window, operand 1, single buffered']
    #allocation6 [shape = 's32[1]{0}', space=sflag, size = 0x4, scoped, tag = 'scoped memory for tpu_custom_call.1']
    #allocation7 [shape = 'u8[1024]{0}', space=vmem, size = 0x400, scoped, tag = 'output window, operand 0, single buffered']
    #allocation8 [shape = 'u8[1024]{0}', space=vmem, size = 0x400, scoped, tag = 'output window, operand 1, single buffered']
    #allocation9 [shape = 's32[1]{0}', space=sflag, size = 0x4, scoped, tag = 'scoped memory for tpu_custom_call.1']
    %9 = vsyncpa [#allocation3], 0
    %10 = vsyncpa [#allocation6], 0
    %11 = vsyncpa [#allocation4], 0
    %12 = vsyncpa [#allocation9], 0
    // Predicated region
    $region2: #{tpu_custom_call.1} parent=1 // pred_check
      _
    $region3: #{tpu_custom_call.1} parent=1 // pred_check_branch
      %14 = sbr.rel (0) target = $region5
    $region4: #{tpu_custom_call.1} parent=1 // pred_region
      %s16 = ssub.s32 256, 256
      %17 = vsyncadd [#allocation3], %s16
      %s18 = sshll.u32 [#allocation2], 4
      %s19 = int_to_ptr.vmem [resolvable:$true] %s18
      %24 = dma.hbm_to_vmem [thread:$0]  %s0, 256, %s19, [#allocation3], 128, 128, 8
    $region5: #{tpu_custom_call.1} parent=1 // pred_fallthru
      _
    // Predicated region
    $region6: #{tpu_custom_call.1} parent=1 // pred_check
      _
    $region7: #{tpu_custom_call.1} parent=1 // pred_check_branch
      %26 = sbr.rel (0) target = $region9
    $region8: #{tpu_custom_call.1} parent=1 // pred_region
      %s28 = ssub.s32 128, 128
      %29 = vsyncadd [#allocation6], %s28
      %s31 = sshll.u32 [#allocation5], 4
      %s32 = int_to_ptr.vmem [resolvable:$true] %s31
      %34 = dma.hbm_to_vmem [thread:$0]  %s1, 128, %s32, [#allocation6]
    $region9: #{tpu_custom_call.1} parent=1 // pred_fallthru
      _
    // Predicated region
    $region10: #{tpu_custom_call.1} parent=1 // pred_check
      _
    $region11: #{tpu_custom_call.1} parent=1 // pred_check_branch
      %36 = sbr.rel (0) target = $region13
    $region12: #{tpu_custom_call.1} parent=1 // pred_region
      %37 = dma.done [#allocation3], 256
    $region13: #{tpu_custom_call.1} parent=1 // pred_fallthru
      _
    // Predicated region
    $region14: #{tpu_custom_call.1} parent=1 // pred_check
      _
    $region15: #{tpu_custom_call.1} parent=1 // pred_check_branch
      %39 = sbr.rel (0) target = $region17
    $region16: #{tpu_custom_call.1} parent=1 // pred_region
      %40 = dma.done [#allocation6], 128
    $region17: #{tpu_custom_call.1} parent=1 // pred_fallthru
      _
    %v41 = vld [vmem:[#allocation2] sm:$0xff]
    %v42 = vld [vmem:[#allocation2 + $0x8] sm:$0xff]
    %v43 = vld [vmem:[#allocation5] sm:$0xff]
    %vm44 = vcmask 261120
    %v46 = vsel %vm44, %v43, 0
    %v49 = vsel %vm44, %v41, 0
    %v52 = vsel %vm44, %v42, 0
    %54 = vmatprep.subr.mxu0 0.0
    %55 = vmatpush1.xpose.msra.mxu0 %v49
    %56 = vmatprep.subr.mxu0 0.0
    %57 = vmatpush1.xpose.msra.mxu0 %v52
    %58 = vmatprep.subr.mxu0 0.0
    %59 = vmatpush1.xpose.msra.mxu0 0.0
    %60 = vmatprep.subr.mxu0 0.0
    %61 = vmatpush1.xpose.msra.mxu0 0.0
    %62 = vmatprep.subr.mxu0 0.0
    %63 = vmatpush1.xpose.msra.mxu0 0.0
    %64 = vmatprep.subr.mxu0 0.0
    %65 = vmatpush1.xpose.msra.mxu0 0.0
    %66 = vmatprep.subr.mxu0 0.0
    %67 = vmatpush1.xpose.msra.mxu0 0.0
    %68 = vmatprep.subr.mxu0 0.0
    %69 = vmatpush1.xpose.msra.mxu0 0.0
    %70 = vmatprep.subr.mxu0 0.0
    %71 = vmatpush1.xpose.msra.mxu0 0.0
    %72 = vmatprep.subr.mxu0 0.0
    %73 = vmatpush1.xpose.msra.mxu0 0.0
    %74 = vmatprep.subr.mxu0 0.0
    %75 = vmatpush1.xpose.msra.mxu0 0.0
    %76 = vmatprep.subr.mxu0 0.0
    %77 = vmatpush1.xpose.msra.mxu0 0.0
    %78 = vmatprep.subr.mxu0 0.0
    %79 = vmatpush1.xpose.msra.mxu0 0.0
    %80 = vmatprep.subr.mxu0 0.0
    %81 = vmatpush1.xpose.msra.mxu0 0.0
    %82 = vmatprep.subr.mxu0 0.0
    %83 = vmatpush1.xpose.msra.mxu0 0.0
    %84 = vmatprep.subr.mxu0 0.0
    %85 = vmatpush1.xpose.msra.mxu0 0.0
    %86 = vmatprep.subr.mxu0 0.0
    %87 = vmatpush1.xpose.msra.mxu0 0.0
    %88 = vmatprep.subr.mxu0 0.0
    %89 = vmatpush1.xpose.msra.mxu0 0.0
    %90 = vmatprep.subr.mxu0 0.0
    %91 = vmatpush1.xpose.msra.mxu0 0.0
    %92 = vmatprep.subr.mxu0 0.0
    %93 = vmatpush1.xpose.msra.mxu0 0.0
    %94 = vmatprep.subr.mxu0 0.0
    %95 = vmatpush1.xpose.msra.mxu0 0.0
    %96 = vmatprep.subr.mxu0 0.0
    %97 = vmatpush1.xpose.msra.mxu0 0.0
    %98 = vmatprep.subr.mxu0 0.0
    %99 = vmatpush1.xpose.msra.mxu0 0.0
    %100 = vmatprep.subr.mxu0 0.0
    %101 = vmatpush1.xpose.msra.mxu0 0.0
    %102 = vmatprep.subr.mxu0 0.0
    %103 = vmatpush1.xpose.msra.mxu0 0.0
    %104 = vmatprep.subr.mxu0 0.0
    %105 = vmatpush1.xpose.msra.mxu0 0.0
    %106 = vmatprep.subr.mxu0 0.0
    %107 = vmatpush1.xpose.msra.mxu0 0.0
    %108 = vmatprep.subr.mxu0 0.0
    %109 = vmatpush1.xpose.msra.mxu0 0.0
    %110 = vmatprep.subr.mxu0 0.0
    %111 = vmatpush1.xpose.msra.mxu0 0.0
    %112 = vmatprep.subr.mxu0 0.0
    %113 = vmatpush1.xpose.msra.mxu0 0.0
    %114 = vmatprep.subr.mxu0 0.0
    %115 = vmatpush1.xpose.msra.mxu0 0.0
    %116 = vmatprep.subr.mxu0 0.0
    %117 = vmatpush1.xpose.msra.mxu0 0.0
    %118 = vmatprep.mubr.f32.mxu0 0.0
    %119 = vmatmul.mubr.f32.gmra.mrb[0].mxu0 %v46
    %v120 = vpop.f32.mrb[0].mxu0
    %v121 = vadd.f32 0.0, %v120
    %v122 = vpop.f32.mrb[0].mxu0
    %123 = vdwg.mxu0
    %vm124 = vcmask 130048
    %v125 = vsel %vm124, %v121, -inf
    %v126 = vrot.slane %v125, 4
    %v127 = vmax.f32 %v125, %v126
    %v128 = vrot.slane %v127, 2
    %v129 = vmax.f32 %v127, %v128
    %v130 = vrot.slane %v129, 1
    %v131 = vmax.f32 %v129, %v130
    %v132 = vsub.f32 %v121, %v131
    %v133 = vmul.f32 %v132, 1.442695
    %v134 = vpow.pop %v133
    %v135 = vsel %vm124, %v134, 0.0
    %v136 = vrot.slane %v135, 4
    %v137 = vadd.f32 %v135, %v136
    %v138 = vrot.slane %v137, 2
    %v139 = vadd.f32 %v137, %v138
    %v140 = vrot.slane %v139, 1
    %v141 = vadd.f32 %v139, %v140
    %v142 = vrcp.pop %v141
    %v143 = vmul.f32 %v134, %v142
    %v144 = vlaneseq
    %v145 = vshrl.u32 %v144, 7
    %v147 = vand.u32 %v143, 4294967288
    %v148 = vsub.s32 7, %v145
    %v149 = vor.u32 %v147, %v148
    %v150 = vsel %vm124, %v149, 2147483648
    %v151 = vrot.slane %v150, 4
    %vm152 = vcmp.gt.s32.totalorder %v150, %v151
    %v153 = vsel %vm152, %v150, %v151
    %v154 = vrot.slane %v153, 2
    %vm155 = vcmp.gt.s32.totalorder %v153, %v154
    %v156 = vsel %vm155, %v153, %v154
    %v157 = vrot.slane %v156, 1
    %vm158 = vcmp.gt.s32.totalorder %v156, %v157
    %v159 = vsel %vm158, %v156, %v157
    %v160 = vand.u32 %v159, 7
    %v161 = vsub.s32 7, %v160
    %v162 = vand.u32 %v159, 4294967288
    %vm164 = vcmask 122880
    %165 = vst.msk [vmem:[#allocation7] sm:$0x1] %vm164, %v161
    %166 = vst.msk [vmem:[#allocation8] sm:$0x1] %vm164, %v162
    %v167 = vadd.f32 %v162, 0.0
    %vm168 = vcmp.eq.s32.totalorder %v149, %v159
    %v169 = vsel %vm168, 2147483648, %v149
    %v170 = vsel %vm124, %v169, 2147483648
    %v171 = vrot.slane %v170, 4
    %vm172 = vcmp.gt.s32.totalorder %v170, %v171
    %v173 = vsel %vm172, %v170, %v171
    %v174 = vrot.slane %v173, 2
    %vm175 = vcmp.gt.s32.totalorder %v173, %v174
    %v176 = vsel %vm175, %v173, %v174
    %v177 = vrot.slane %v176, 1
    %vm178 = vcmp.gt.s32.totalorder %v176, %v177
    %v179 = vsel %vm178, %v176, %v177
    %v180 = vand.u32 %v179, 7
    %v181 = vsub.s32 7, %v180
    %v182 = vand.u32 %v179, 4294967288
    %184 = vst.msk [vmem:[#allocation7 + $0x1] sm:$0x1] %vm164, %v181
    %185 = vst.msk [vmem:[#allocation8 + $0x1] sm:$0x1] %vm164, %v182
    %v186 = vadd.f32 %v167, %v182
    %v187 = vld [vmem:[#allocation8] sm:$0x3]
    %v188 = vadd.f32 %v186, 1e-20
    %v189 = vrcp.pop %v188
    %v190 = vmul.f32 %v187, %v189
    %vm191 = vcmask 123904
    %192 = vst.msk [vmem:[#allocation8] sm:$0x3] %vm191, %v190
    // Predicated region
    $region18: #{tpu_custom_call.1} parent=1 // pred_check
      _
    $region19: #{tpu_custom_call.1} parent=1 // pred_check_branch
      %194 = sbr.rel (0) target = $region21
    $region20: #{tpu_custom_call.1} parent=1 // pred_region
      %s196 = ssub.s32 32, 32
      %197 = vsyncadd [#allocation4], %s196
      %s199 = sshll.u32 [#allocation7], 4
      %s200 = int_to_ptr.vmem [resolvable:$true] %s199
      %202 = dma.vmem_to_hbm [thread:$0]  %s200, 32, %s2, [#allocation4]
    $region21: #{tpu_custom_call.1} parent=1 // pred_fallthru
      _
    // Predicated region
    $region22: #{tpu_custom_call.1} parent=1 // pred_check
      _
    $region23: #{tpu_custom_call.1} parent=1 // pred_check_branch
      %204 = sbr.rel (0) target = $region25
    $region24: #{tpu_custom_call.1} parent=1 // pred_region
      %s206 = ssub.s32 32, 32
      %207 = vsyncadd [#allocation9], %s206
      %s209 = sshll.u32 [#allocation8], 4
      %s210 = int_to_ptr.vmem [resolvable:$true] %s209
      %212 = dma.vmem_to_hbm [thread:$0]  %s210, 32, %s3, [#allocation9]
    $region25: #{tpu_custom_call.1} parent=1 // pred_fallthru
      _
    // Predicated region
    $region26: #{tpu_custom_call.1} parent=1 // pred_check
      _
    $region27: #{tpu_custom_call.1} parent=1 // pred_check_branch
      %214 = sbr.rel (0) target = $region29
    $region28: #{tpu_custom_call.1} parent=1 // pred_region
      %215 = dma.done [#allocation4], 32
    $region29: #{tpu_custom_call.1} parent=1 // pred_fallthru
      _
    // Predicated region
    $region30: #{tpu_custom_call.1} parent=1 // pred_check
      _
    $region31: #{tpu_custom_call.1} parent=1 // pred_check_branch
      %217 = sbr.rel (0) target = $region33
    $region32: #{tpu_custom_call.1} parent=1 // pred_region
      %218 = dma.done [#allocation9], 32
    $region33: #{tpu_custom_call.1} parent=1 // pred_fallthru
      _
    %219 = vsyncpa [#allocation3], 1
    %220 = vsyncpa [#allocation6], 1
    %221 = vsyncpa [#allocation4], 1
    %222 = vsyncpa [#allocation9], 1

</llo_original>
